<compile_context>
chip_gen: v7x
topology: tpu7x:2x2x1
jax: 0.10.0
libtpu: 0.0.40
codegen_flags: <defaults>
</compile_context>

<pallas_src>
import jax
import jax.numpy as jnp
from jax.experimental import pallas as pl
from jax.experimental.pallas import tpu as pltpu


# Pipelined VMEM budget target for (x block + out block) * 2 buffers.
_VMEM_TILE_BUDGET_BYTES = 24 << 20
_VMEM_LIMIT_BYTES = 48 << 20  # safe on v5e/v6e (128 MiB) and v7x (64 MiB physical)


def _channel_attention_kernel(x_ref, w_ref, b_ref, o_ref):
    # x_ref: (b_tile, T, c_tile) f32 VMEM   (C on lanes, B*T on sublanes)
    # w_ref: (1, T, 1) f32 VMEM   -- fused weight  w1 @ w2
    # b_ref: (1,)      f32 SMEM   -- fused bias    b1 @ w2 + b2
    # o_ref: (T, b_tile, c_tile) f32 VMEM
    x = x_ref[...]                                        # (bt, T, ct)

    # att[b, c] = sigmoid( sum_t x[b, t, c] * w_eff[t] + b_eff )
    acc = jnp.sum(x * w_ref[...], axis=1)                 # (bt, ct)  sublane-axis reduce
    att = jax.nn.sigmoid(acc + b_ref[0])                  # (bt, ct)

    # out[t, b, c] = att[b, c] * x[b, t, c]  -- single full-tile multiply + one relayout
    out3 = att[:, None, :] * x                            # (bt, T, ct)
    o_ref[...] = jnp.transpose(out3, (1, 0, 2)).astype(o_ref.dtype)


def _tile_candidates(n, multiple):
    """Divisors of n that are multiples of `multiple`, descending; fallback [n]."""
    cands = [d for d in range(multiple, n + 1, multiple) if n % d == 0]
    return sorted(cands, reverse=True) if cands else [n]


def _pick_tiles(B, T, C):
    """Byte-budgeted (b_tile, c_tile): lane-dense first, then sublane, under VMEM budget."""
    # Per grid step: 2 buffers * (x block + out block) = 16 * b_tile * T * c_tile bytes.
    budget_elems = max(_VMEM_TILE_BUDGET_BYTES // (16 * T), 1)
    b_cands = _tile_candidates(B, 8)      # sublane-friendly
    c_cands = _tile_candidates(C, 128)    # lane-dense output stores (biggest lever)

    chosen = None
    for ct in c_cands:                    # prefer widest lane-dense tile that fits
        for bt in b_cands:
            if bt * ct <= budget_elems:
                chosen = (bt, ct)
                break
        if chosen is not None:
            break
    if chosen is None:
        # Even the smallest legal tiles exceed the budget target (tiny arrays with
        # awkward divisors); take them anyway — still legal under the (8,128) rule.
        chosen = (b_cands[-1], c_cands[-1])
    b_tile, c_tile = chosen

    # v7x has 2 TensorCores sharded over 'parallel' grid axes: try to expose >=2 steps.
    if (B // b_tile) * (C // c_tile) < 2:
        smaller_c = [c for c in c_cands if c < c_tile]
        smaller_b = [b for b in b_cands if b < b_tile]
        if smaller_c:
            c_tile = smaller_c[0]
        elif smaller_b:
            b_tile = smaller_b[0]
    return b_tile, c_tile


def channel_attention(x, w1, b1, w2, b2):
    """x: (B, T, C) float32. Returns (T, B, C) float32 (matches the PyTorch module).

    w1: (T, 8), b1: (1, 8), w2: (8, 1), b2: (1, 1)  (Linear weights stored transposed).
    """
    B, T, C = x.shape

    # Fuse Linear(T,8) -> Linear(8,1): exact (no activation in between).
    w_eff = (w1 @ w2).reshape(1, T, 1).astype(jnp.float32)    # (1, T, 1)
    b_eff = (b1 @ w2 + b2).reshape(1).astype(jnp.float32)     # (1,)

    b_tile, c_tile = _pick_tiles(B, T, C)
    grid = (B // b_tile, C // c_tile)

    cost = pl.CostEstimate(
        flops=3 * B * T * C,            # reduce (mul+add) + output scaling
        transcendentals=B * C,          # sigmoid
        bytes_accessed=2 * B * T * C * 4,
    )

    out = pl.pallas_call(
        _channel_attention_kernel,
        out_shape=jax.ShapeDtypeStruct((T, B, C), jnp.float32),
        grid_spec=pltpu.PrefetchScalarGridSpec(
            num_scalar_prefetch=0,
            grid=grid,
            in_specs=[
                pl.BlockSpec((b_tile, T, c_tile), lambda bi, ci: (bi, 0, ci)),
                pl.BlockSpec((1, T, 1), lambda bi, ci: (0, 0, 0)),            # w_eff
                pl.BlockSpec(memory_space=pltpu.MemorySpace.SMEM),            # b_eff
            ],
            out_specs=pl.BlockSpec((T, b_tile, c_tile), lambda bi, ci: (0, bi, ci)),
        ),
        compiler_params=pltpu.CompilerParams(
            dimension_semantics=("parallel", "parallel"),
            vmem_limit_bytes=_VMEM_LIMIT_BYTES,
        ),
        cost_estimate=cost,
    )(x, w_eff, b_eff)
    return out


def _reference(x, w1, b1, w2, b2):
    y = jnp.transpose(x, (0, 2, 1))                            # (B, C, T)
    h = jnp.einsum("bct,th->bch", y, w1) + b1                  # (B, C, 8)
    a = jax.nn.sigmoid(jnp.einsum("bch,ho->bco", h, w2) + b2)  # (B, C, 1)
    out = a * y
    return jnp.transpose(out, (2, 0, 1))                       # (T, B, C)


def _make_inputs(key, B, T, C):
    kx, k1, k2, k3, k4 = jax.random.split(key, 5)
    x = jax.random.normal(kx, (B, T, C), dtype=jnp.float32)
    # nn.Linear(T, 8): weight (8, T), bias (8,) -> stored transposed as (T, 8)
    bound1 = 1.0 / jnp.sqrt(T)
    w1 = jax.random.uniform(k1, (T, 8), jnp.float32, -bound1, bound1)
    b1 = jax.random.uniform(k2, (1, 8), jnp.float32, -bound1, bound1)
    # nn.Linear(8, 1): weight (1, 8), bias (1,) -> stored transposed as (8, 1)
    bound2 = 1.0 / jnp.sqrt(8.0)
    w2 = jax.random.uniform(k3, (8, 1), jnp.float32, -bound2, bound2)
    b2 = jax.random.uniform(k4, (1, 1), jnp.float32, -bound2, bound2)
    return x, w1, b1, w2, b2


if __name__ == "__main__":
    key = jax.random.PRNGKey(0)
    k_small, k_big = jax.random.split(key, 2)

    # Small shape matching the module's usage (time_step = 8).
    B, T, C = 2, 8, 32
    x, w1, b1, w2, b2 = _make_inputs(k_small, B, T, C)
    out = channel_attention(x, w1, b1, w2, b2)
    jax.block_until_ready(out)
    ref = _reference(x, w1, b1, w2, b2)
    assert out.shape == (T, B, C), out.shape
    assert jnp.allclose(out, ref, atol=1e-5, rtol=1e-5), "mismatch vs reference (small)"

    # Slightly larger shape to exercise tiled (multiple-of-8 / multiple-of-128) blocks.
    B2, T2, C2 = 16, 32, 256
    x2, w1b, b1b, w2b, b2b = _make_inputs(k_big, B2, T2, C2)
    out2 = channel_attention(x2, w1b, b1b, w2b, b2b)
    jax.block_until_ready(out2)
    ref2 = _reference(x2, w1b, b1b, w2b, b2b)
    assert out2.shape == (T2, B2, C2), out2.shape
    assert jnp.allclose(out2, ref2, atol=1e-4, rtol=1e-4), "mismatch vs reference (tiled)"

    print("KERNEL_OK")
</pallas_src>

<mosaic_0001>
module attributes {stable_mosaic.version = 11 : i64} {
  func.func @_channel_attention_kernel(%arg0: i32, %arg1: i32, %arg2: memref<2x8x32xf32, #tpu.memory_space<vmem>>, %arg3: memref<1x8x1xf32, #tpu.memory_space<vmem>>, %arg4: memref<1xf32, #tpu.memory_space<smem>>, %arg5: memref<8x2x32xf32, #tpu.memory_space<vmem>>) attributes {dimension_semantics = [#tpu.dimension_semantics<parallel>, #tpu.dimension_semantics<parallel>], iteration_bounds = array<i64: 1, 1>, scalar_prefetch = 0 : i64, scratch_operands = 0 : i64, tpu.core_type = #tpu.core_type<tc>, window_params = [{transform_indices = @transform_0, window_bounds = array<i64: 2, 8, 32>}, {pipeline_mode = #tpu.pipeline_mode<synchronous>, transform_indices = @transform_1, window_bounds = array<i64: 1, 8, 1>}, {transform_indices = @transform_2, window_bounds = array<i64: 1>}, {transform_indices = @transform_3, window_bounds = array<i64: 8, 2, 32>}]} {
    %c0 = arith.constant 0 : index
    %c0_0 = arith.constant 0 : index
    %c0_1 = arith.constant 0 : index
    %0 = vector.load %arg2[%c0, %c0_0, %c0_1] : memref<2x8x32xf32, #tpu.memory_space<vmem>>, vector<2x8x32xf32>
    %c0_2 = arith.constant 0 : index
    %c0_3 = arith.constant 0 : index
    %c0_4 = arith.constant 0 : index
    %1 = vector.load %arg3[%c0_2, %c0_3, %c0_4] : memref<1x8x1xf32, #tpu.memory_space<vmem>>, vector<1x8x1xf32>
    %2 = vector.broadcast %1 : vector<1x8x1xf32> to vector<2x8x32xf32>
    %3 = arith.mulf %0, %2 : vector<2x8x32xf32>
    %cst = arith.constant dense<0.000000e+00> : vector<2x32xf32>
    %4 = vector.multi_reduction <add>, %3, %cst [1] : vector<2x8x32xf32> to vector<2x32xf32>
    %c0_5 = arith.constant 0 : index
    %5 = memref.load %arg4[%c0_5] : memref<1xf32, #tpu.memory_space<smem>>
    %6 = vector.broadcast %5 : f32 to vector<2x32xf32>
    %7 = arith.addf %4, %6 : vector<2x32xf32>
    %8 = arith.negf %7 : vector<2x32xf32>
    %9 = math.exp %8 : vector<2x32xf32>
    %cst_6 = arith.constant 1.000000e+00 : f32
    %10 = vector.broadcast %cst_6 : f32 to vector<2x32xf32>
    %11 = arith.addf %10, %9 : vector<2x32xf32>
    %12 = arith.divf %10, %11 : vector<2x32xf32>
    %13 = vector.shape_cast %12 : vector<2x32xf32> to vector<2x1x32xf32>
    %14 = vector.broadcast %13 : vector<2x1x32xf32> to vector<2x8x32xf32>
    %15 = arith.mulf %14, %0 : vector<2x8x32xf32>
    %16 = tpu.transpose %15, [1, 0, 2] : vector<2x8x32xf32> -> vector<8x2x32xf32>
    %c0_7 = arith.constant 0 : index
    %c0_8 = arith.constant 0 : index
    %c0_9 = arith.constant 0 : index
    %17 = vector.load %arg5[%c0_7, %c0_8, %c0_9] : memref<8x2x32xf32, #tpu.memory_space<vmem>>, vector<8x2x32xf32>
    tpu.vector_store %arg5[%c0_7, %c0_8, %c0_9], %16 {strides = array<i32>} : memref<8x2x32xf32, #tpu.memory_space<vmem>>, vector<8x2x32xf32>,
    return
  }
  func.func @transform_0(%arg0: i32, %arg1: i32) -> (i32, i32, i32) {
    %c0_i32 = arith.constant 0 : i32
    %c0_i32_0 = arith.constant 0 : i32
    return %arg0, %c0_i32, %arg1 : i32, i32, i32
  }
  func.func @transform_1(%arg0: i32, %arg1: i32) -> (i32, i32, i32) {
    %c0_i32 = arith.constant 0 : i32
    %c0_i32_0 = arith.constant 0 : i32
    %c0_i32_1 = arith.constant 0 : i32
    %c0_i32_2 = arith.constant 0 : i32
    return %c0_i32, %c0_i32_0, %c0_i32_1 : i32, i32, i32
  }
  func.func @transform_2(%arg0: i32, %arg1: i32) -> i32 {
    %c0_i32 = arith.constant 0 : i32
    %c0_i32_0 = arith.constant 0 : i32
    return %c0_i32 : i32
  }
  func.func @transform_3(%arg0: i32, %arg1: i32) -> (i32, i32, i32) {
    %c0_i32 = arith.constant 0 : i32
    %c0_i32_0 = arith.constant 0 : i32
    return %c0_i32, %arg0, %arg1 : i32, i32, i32
  }
}

</mosaic_0001>

<llo_original>
// kernel: tpu_custom_call.1
$region0: #{tpu_custom_call.1}
  #allocation0 [shape = 'u32[]', space=smem, size = 0x4, offset = 0x4, fixed_abs, tag = 'smem constant byte address 0x4 - core index']
  #allocation1 [shape = 'u32[144,128]{1,0:T(1,128)}', space=vmem, size = 0x12000, scoped, tag = 'internal scratch']
  #allocation2 [shape = 'f32[1]{0:T(128)S(6)}', space=smem, size = 0x200, scoped, tag = 'scoped memory for tpu_custom_call.1']
  %s0 = inlined_call_operand.hbm [shape: f32[2,8,32], index: 0, kind: input, shape index: {}]
  %s1 = inlined_call_operand.vmem [shape: f32[1,8,1], index: 1, kind: input, shape index: {}]
  %s2 = inlined_call_operand.<no memory space> [shape: f32[1], index: 2, kind: input, shape index: {}]
  %s3 = inlined_call_operand.hbm [shape: f32[8,2,32], index: 3, kind: output, shape index: {}]
  %s4 = sld [smem:[#allocation0]]
  $region26: #{tpu_custom_call.1} parent=0
    _
  %s6 = ssub.s32 1, %s4
  %s7 = scalar_select 0, %s6, %s4
  %8 = sst [smem:[#allocation2]] %s2
  $region1: #{tpu_custom_call.1} parent=0
    #allocation3 [shape = 'u8[8192]{0}', space=vmem, size = 0x2000, scoped, tag = 'input window, operand 0, single buffered']
    #allocation4 [shape = 's32[1]{0}', space=sflag, size = 0x4, scoped, tag = 'scoped memory for tpu_custom_call.1']
    #allocation5 [shape = 's32[1]{0}', space=sflag, size = 0x4, scoped, tag = 'scoped memory for tpu_custom_call.1']
    #allocation6 [shape = 'u8[8192]{0}', space=vmem, size = 0x2000, scoped, tag = 'output window, operand 0, single buffered']
    %9 = vsyncpa [#allocation4], 0
    %10 = vsyncpa [#allocation5], 0
    // Predicated region
    $region2: #{tpu_custom_call.1} parent=1 // pred_check
      _
    $region3: #{tpu_custom_call.1} parent=1 // pred_check_branch
      %12 = sbr.rel (0) target = $region5
    $region4: #{tpu_custom_call.1} parent=1 // pred_region
      %s14 = ssub.s32 256, 256
      %15 = vsyncadd [#allocation4], %s14
      %s16 = sshll.u32 [#allocation3], 4
      %s17 = int_to_ptr.vmem [resolvable:$true] %s16
      %22 = dma.hbm_to_vmem [thread:$0]  %s0, 256, %s17, [#allocation4], 128, 128, 8
    $region5: #{tpu_custom_call.1} parent=1 // pred_fallthru
      _
    // Predicated region
    $region6: #{tpu_custom_call.1} parent=1 // pred_check
      _
    $region7: #{tpu_custom_call.1} parent=1 // pred_check_branch
      %24 = sbr.rel (0) target = $region9
    $region8: #{tpu_custom_call.1} parent=1 // pred_region
      _
    $region9: #{tpu_custom_call.1} parent=1 // pred_fallthru
      _
    // Predicated region
    $region10: #{tpu_custom_call.1} parent=1 // pred_check
      _
    $region11: #{tpu_custom_call.1} parent=1 // pred_check_branch
      %26 = sbr.rel (0) target = $region13
    $region12: #{tpu_custom_call.1} parent=1 // pred_region
      _
    $region13: #{tpu_custom_call.1} parent=1 // pred_fallthru
      _
    // Predicated region
    $region14: #{tpu_custom_call.1} parent=1 // pred_check
      _
    $region15: #{tpu_custom_call.1} parent=1 // pred_check_branch
      %28 = sbr.rel (0) target = $region17
    $region16: #{tpu_custom_call.1} parent=1 // pred_region
      %29 = dma.done [#allocation4], 256
    $region17: #{tpu_custom_call.1} parent=1 // pred_fallthru
      _
    %v30 = vld [vmem:[#allocation3] sm:$0xff]
    %v31 = vld [vmem:[#allocation3 + $0x8] sm:$0xff]
    %v32 = vld [vmem:[%s1] sm:$0xff]
    %34 = vset.pattern.permute.xlu0 0
    %35 = vperm.xlu0 %34, %v32
    %v36 = vpop.permute.xlu0 %35
    %v38 = vmul.f32 %v30, %v36
    %v39 = vmul.f32 %v31, %v36
    %vm40 = vcmask 261120
    %v41 = vsel %vm40, %v38, 0.0
    %v42 = vrot.slane %v41, 4
    %v43 = vadd.f32 %v41, %v42
    %v44 = vrot.slane %v43, 2
    %v45 = vadd.f32 %v43, %v44
    %v46 = vrot.slane %v45, 1
    %v47 = vadd.f32 %v45, %v46
    %v48 = vsel %vm40, %v39, 0.0
    %v49 = vrot.slane %v48, 4
    %v50 = vadd.f32 %v48, %v49
    %v51 = vrot.slane %v50, 2
    %v52 = vadd.f32 %v50, %v51
    %v53 = vrot.slane %v52, 1
    %v54 = vadd.f32 %v52, %v53
    %s55 = sld [smem:[#allocation2]]
    %v56 = vstv %s55
    %v57 = vadd.f32 %v47, %v56
    %v58 = vadd.f32 %v54, %v56
    %v59 = vxor.u32 %v57, 2147483648
    %v60 = vxor.u32 %v58, 2147483648
    %v61 = vmul.f32 %v59, 1.442695
    %v62 = vpow.pop %v61
    %v63 = vmul.f32 %v60, 1.442695
    %v64 = vpow.pop %v63
    %v65 = vadd.f32 %v62, 1.0
    %v66 = vadd.f32 %v64, 1.0
    %v67 = vrcp.pop %v65
    %v68 = vmul.f32 1.0, %v67
    %v69 = vrcp.pop %v66
    %v70 = vmul.f32 1.0, %v69
    %v71 = vmul.f32 %v68, %v30
    %v72 = vmul.f32 %v70, %v31
    %v73 = vcombine.high %v71, 0.0
    %v75 = vunpack.c.l.s4 1983009808
    %v76 = vunpack.c.0.s8 %v75
    %v77 = vlaneseq
    %v78 = vshrl.u32 %v77, 7
    %v79 = vsub.s32 %v76, %v78
    %v80 = vrot.slane %v71, %v79
    %v82 = vunpack.c.l.s4 1983009808
    %v83 = vunpack.c.0.s8 %v82
    %v84 = vlaneseq
    %v85 = vshrl.u32 %v84, 7
    %v86 = vsub.s32 %v83, %v85
    %v87 = vrot.slane %v73, %v86
    %v88 = vcombine.high %v72, 0.0
    %v90 = vunpack.c.l.s4 1983009808
    %v91 = vunpack.c.0.s8 %v90
    %v92 = vlaneseq
    %v93 = vshrl.u32 %v92, 7
    %v94 = vsub.s32 %v91, %v93
    %v95 = vrot.slane %v72, %v94
    %v97 = vunpack.c.l.s4 1983009808
    %v98 = vunpack.c.0.s8 %v97
    %v99 = vlaneseq
    %v100 = vshrl.u32 %v99, 7
    %v101 = vsub.s32 %v98, %v100
    %v102 = vrot.slane %v88, %v101
    %v103 = vcombine.low %v80, %v95
    %v104 = vcombine.high %v80, %v95
    %v106 = vunpack.c.l.s4 1934713408
    %v107 = vunpack.c.0.s8 %v106
    %v108 = vlaneseq
    %v109 = vshrl.u32 %v108, 7
    %v110 = vsub.s32 %v107, %v109
    %v111 = vrot.slane %v103, %v110
    %v113 = vunpack.c.l.s4 1934713408
    %v114 = vunpack.c.0.s8 %v113
    %v115 = vlaneseq
    %v116 = vshrl.u32 %v115, 7
    %v117 = vsub.s32 %v114, %v116
    %v118 = vrot.slane %v104, %v117
    %v119 = vcombine.low %v87, %v102
    %v120 = vcombine.high %v87, %v102
    %v122 = vunpack.c.l.s4 1934713408
    %v123 = vunpack.c.0.s8 %v122
    %v124 = vlaneseq
    %v125 = vshrl.u32 %v124, 7
    %v126 = vsub.s32 %v123, %v125
    %v127 = vrot.slane %v119, %v126
    %v129 = vunpack.c.l.s4 1934713408
    %v130 = vunpack.c.0.s8 %v129
    %v131 = vlaneseq
    %v132 = vshrl.u32 %v131, 7
    %v133 = vsub.s32 %v130, %v132
    %v134 = vrot.slane %v120, %v133
    %v135 = vcombine.high %v111, 0.0
    %v136 = vcombine.high %v118, 0.0
    %v137 = vcombine.high %v127, 0.0
    %v138 = vcombine.high %v134, 0.0
    %vm139 = vcmask 254976
    %140 = vst.msk [vmem:[#allocation6] sm:$0x3] %vm139, %v111
    %141 = vst.msk [vmem:[#allocation6 + $0x2] sm:$0x3] %vm139, %v135
    %142 = vst.msk [vmem:[#allocation6 + $0x4] sm:$0x3] %vm139, %v118
    %143 = vst.msk [vmem:[#allocation6 + $0x6] sm:$0x3] %vm139, %v136
    %144 = vst.msk [vmem:[#allocation6 + $0x8] sm:$0x3] %vm139, %v127
    %145 = vst.msk [vmem:[#allocation6 + $0xa] sm:$0x3] %vm139, %v137
    %146 = vst.msk [vmem:[#allocation6 + $0xc] sm:$0x3] %vm139, %v134
    %147 = vst.msk [vmem:[#allocation6 + $0xe] sm:$0x3] %vm139, %v138
    // Predicated region
    $region18: #{tpu_custom_call.1} parent=1 // pred_check
      _
    $region19: #{tpu_custom_call.1} parent=1 // pred_check_branch
      %149 = sbr.rel (0) target = $region21
    $region20: #{tpu_custom_call.1} parent=1 // pred_region
      %s151 = ssub.s32 256, 256
      %152 = vsyncadd [#allocation5], %s151
      %s153 = sshll.u32 [#allocation6], 4
      %s154 = int_to_ptr.vmem [resolvable:$true] %s153
      %159 = dma.vmem_to_hbm [thread:$0]  %s154, 256, %s3, [#allocation5], 32, 32, 2
    $region21: #{tpu_custom_call.1} parent=1 // pred_fallthru
      _
    // Predicated region
    $region22: #{tpu_custom_call.1} parent=1 // pred_check
      _
    $region23: #{tpu_custom_call.1} parent=1 // pred_check_branch
      %161 = sbr.rel (0) target = $region25
    $region24: #{tpu_custom_call.1} parent=1 // pred_region
      %162 = dma.done [#allocation5], 256
    $region25: #{tpu_custom_call.1} parent=1 // pred_fallthru
      _
    %163 = vsyncpa [#allocation4], 1
    %164 = vsyncpa [#allocation5], 1

</llo_original>
